<compile_context>
chip_gen: v5e
topology: v5e:2x2
jax: 0.10.0
libtpu: 0.0.40
codegen_flags: <defaults>
</compile_context>

<pallas_src>
import jax
import jax.numpy as jnp
from jax import lax
from jax.experimental import pallas as pl
from jax.experimental.pallas import tpu as pltpu


def _round_up(x, m):
    return ((x + m - 1) // m) * m


def _mlp_kernel(x_ref, w1_ref, b1_ref, w2_ref, b2_ref, o_ref):
    """Normalize (LayerNorm w/o affine) -> Linear1 -> ReLU -> Linear2.

    The LayerNorm affine has been folded into (w1, b1) by the wrapper.
    """
    x = x_ref[...].astype(jnp.float32)

    # Single-pass LayerNorm statistics: var = E[x^2] - mean^2 (all f32).
    mean = jnp.mean(x, axis=-1, keepdims=True)
    mean_sq = jnp.mean(x * x, axis=-1, keepdims=True)
    var = jnp.maximum(mean_sq - mean * mean, 0.0)
    xn = (x - mean) * lax.rsqrt(var + 1e-5)  # eps matches torch.nn.LayerNorm

    # Linear1 + ReLU (MXU in the weights' dtype, f32 accumulation).
    h = jnp.dot(xn.astype(w1_ref.dtype), w1_ref[...],
                preferred_element_type=jnp.float32) + b1_ref[...]
    h = jnp.maximum(h, 0.0)

    # Linear2.
    out = jnp.dot(h.astype(w2_ref.dtype), w2_ref[...],
                  preferred_element_type=jnp.float32) + b2_ref[...]

    # TODO(synk): end_norm is None in this configuration; if provided it is an
    # arbitrary callable and would be applied to `out` here.
    o_ref[...] = out.astype(o_ref.dtype)


def shallow_fully_connected(x, gamma, beta, w1, b1, w2, b2, *,
                            block_n=512,
                            matmul_dtype=jnp.bfloat16,
                            lane_pad_out=True):
    """ShallowFullyConnected forward.  x: [..., d_in] -> [..., d_out]."""
    d_in = x.shape[-1]
    hidden = w1.shape[1]
    d_out = w2.shape[1]
    out_dtype = x.dtype

    # Flatten leading dims to a single row axis (torch Linear/LayerNorm semantics).
    lead_shape = x.shape[:-1]
    n = 1
    for s in lead_shape:
        n *= int(s)
    x2 = jnp.reshape(x, (n, d_in))

    f32 = jnp.float32
    gamma = jnp.reshape(gamma, (1, d_in)).astype(f32)
    beta = jnp.reshape(beta, (1, d_in)).astype(f32)
    w1 = w1.astype(f32)
    b1 = jnp.reshape(b1, (1, hidden)).astype(f32)
    w2 = w2.astype(f32)
    b2 = jnp.reshape(b2, (1, d_out)).astype(f32)

    # Fold the LayerNorm affine into Linear1 (wrapper-side, done once per call).
    w1_f = jnp.reshape(gamma, (d_in, 1)) * w1      # diag(gamma) @ W1
    b1_f = beta @ w1 + b1                          # beta @ W1 + b1

    # Lane-dense output: pad d_out to a multiple of 128 lanes (unmasked stores),
    # slice back after the kernel.
    d_out_p = d_out
    w2_f, b2_f = w2, b2
    if lane_pad_out and d_out % 128 != 0:
        d_out_p = _round_up(d_out, 128)
        w2_f = jnp.pad(w2, ((0, 0), (0, d_out_p - d_out)))
        b2_f = jnp.pad(b2, ((0, 0), (0, d_out_p - d_out)))

    # MXU operands in bf16 (native path on v5e/v6e/v7x); biases stay f32.
    w1_k = w1_f.astype(matmul_dtype)
    w2_k = w2_f.astype(matmul_dtype)

    # Row tiling: large, sweepable tiles, 8-row (sublane) aligned; pad N so the
    # grid divides evenly (padded rows are zero -> normalize to zero, no NaN).
    block_rows = _round_up(max(8, min(block_n, _round_up(n, 8))), 8)
    n_pad = _round_up(n, block_rows)
    x_k = x2 if n_pad == n else jnp.pad(x2, ((0, n_pad - n), (0, 0)))

    grid = (n_pad // block_rows,)

    # Scoped-VMEM budget: double-buffered x/out tiles + resident (grid-invariant)
    # weight panels + slack, clamped to the v7x physical ceiling (64 MiB per TC).
    def _isz(dt):
        return jnp.dtype(dt).itemsize

    tile_bytes = (block_rows * d_in * _isz(x_k.dtype)
                  + block_rows * d_out_p * _isz(out_dtype))
    weight_bytes = (w1_k.size * _isz(w1_k.dtype) + b1_f.size * 4
                    + w2_k.size * _isz(w2_k.dtype) + b2_f.size * 4)
    vmem_limit = int(min(64 * 1024 * 1024,
                         max(2 * (2 * tile_bytes + weight_bytes),
                             16 * 1024 * 1024)))

    out = pl.pallas_call(
        _mlp_kernel,
        out_shape=jax.ShapeDtypeStruct((n_pad, d_out_p), out_dtype),
        grid_spec=pltpu.PrefetchScalarGridSpec(
            num_scalar_prefetch=0,
            grid=grid,
            in_specs=[
                pl.BlockSpec((block_rows, d_in), lambda i: (i, 0)),   # x row tile
                pl.BlockSpec((d_in, hidden), lambda i: (0, 0)),       # W1 (affine-folded)
                pl.BlockSpec((1, hidden), lambda i: (0, 0)),          # b1 (affine-folded)
                pl.BlockSpec((hidden, d_out_p), lambda i: (0, 0)),    # W2 (lane-padded)
                pl.BlockSpec((1, d_out_p), lambda i: (0, 0)),         # b2 (lane-padded)
            ],
            out_specs=pl.BlockSpec((block_rows, d_out_p), lambda i: (i, 0)),
        ),
        compiler_params=pltpu.CompilerParams(
            dimension_semantics=("parallel",),   # megacore sharding on v7x
            vmem_limit_bytes=vmem_limit,
        ),
    )(x_k, w1_k, b1_f, w2_k, b2_f)

    out = out[:n, :d_out]
    return jnp.reshape(out, lead_shape + (d_out,))


def _reference(x, gamma, beta, w1, b1, w2, b2):
    x = x.astype(jnp.float32)
    mean = jnp.mean(x, axis=-1, keepdims=True)
    var = jnp.mean((x - mean) ** 2, axis=-1, keepdims=True)
    xn = (x - mean) / jnp.sqrt(var + 1e-5)
    xn = xn * gamma + beta
    h = jnp.maximum(xn @ w1 + b1, 0.0)
    return h @ w2 + b2


if __name__ == "__main__":
    # Small shapes consistent with the module's forward: [N, input_dim].
    N = 16
    input_dim = 32
    hidden_dim = 64
    output_dim = 16

    key = jax.random.PRNGKey(0)
    kx, kg, kbt, kw1, kb1, kw2, kb2 = jax.random.split(key, 7)

    x = jax.random.normal(kx, (N, input_dim), dtype=jnp.float32)

    # Deterministic synthetic parameters (non-trivial gamma/beta to exercise folding).
    gamma = 1.0 + 0.1 * jax.random.normal(kg, (input_dim,), dtype=jnp.float32)
    beta = 0.05 * jax.random.normal(kbt, (input_dim,), dtype=jnp.float32)
    # Linear weights stored transposed relative to PyTorch: [in, out].
    w1 = jax.random.normal(kw1, (input_dim, hidden_dim), dtype=jnp.float32) * 0.1
    b1 = jax.random.normal(kb1, (hidden_dim,), dtype=jnp.float32) * 0.01
    w2 = jax.random.normal(kw2, (hidden_dim, output_dim), dtype=jnp.float32) * 0.1
    b2 = jax.random.normal(kb2, (output_dim,), dtype=jnp.float32) * 0.01

    ref = _reference(x, gamma, beta, w1, b1, w2, b2)

    # Default (performance) path: bf16 MXU operands, lane-padded output, big tiles.
    out = shallow_fully_connected(x, gamma, beta, w1, b1, w2, b2)
    out = jax.block_until_ready(out)
    assert out.shape == (N, output_dim)
    assert jnp.allclose(out, ref, atol=3e-2, rtol=3e-2), "bf16 path mismatch vs reference"

    # Full-f32 path (no lane padding, small blocks -> 2 grid steps) for a tight check.
    out_f32 = shallow_fully_connected(
        x, gamma, beta, w1, b1, w2, b2,
        matmul_dtype=jnp.float32, block_n=8, lane_pad_out=False)
    out_f32 = jax.block_until_ready(out_f32)
    assert out_f32.shape == (N, output_dim)
    assert jnp.allclose(out_f32, ref, atol=1e-4, rtol=1e-4), "f32 path mismatch vs reference"

    # Arbitrary leading dims (e.g. [batch, nodes, feat]) exercise the flatten/restore path.
    x3 = jax.random.normal(kx, (2, 8, input_dim), dtype=jnp.float32)
    ref3 = _reference(x3, gamma, beta, w1, b1, w2, b2)
    out3 = shallow_fully_connected(x3, gamma, beta, w1, b1, w2, b2,
                                   matmul_dtype=jnp.float32, lane_pad_out=False)
    out3 = jax.block_until_ready(out3)
    assert out3.shape == (2, 8, output_dim)
    assert jnp.allclose(out3, ref3, atol=1e-4, rtol=1e-4), "3-D input mismatch vs reference"

    print("KERNEL_OK")
</pallas_src>

<mosaic_0001>
module attributes {stable_mosaic.version = 11 : i64} {
  func.func @_mlp_kernel(%arg0: i32, %arg1: memref<16x32xf32, #tpu.memory_space<vmem>>, %arg2: memref<32x64xbf16, #tpu.memory_space<vmem>>, %arg3: memref<1x64xf32, #tpu.memory_space<vmem>>, %arg4: memref<64x128xbf16, #tpu.memory_space<vmem>>, %arg5: memref<1x128xf32, #tpu.memory_space<vmem>>, %arg6: memref<16x128xf32, #tpu.memory_space<vmem>>) attributes {dimension_semantics = [#tpu.dimension_semantics<parallel>], iteration_bounds = array<i64: 1>, scalar_prefetch = 0 : i64, scratch_operands = 0 : i64, tpu.core_type = #tpu.core_type<tc>, window_params = [{transform_indices = @transform_0, window_bounds = array<i64: 16, 32>}, {pipeline_mode = #tpu.pipeline_mode<synchronous>, transform_indices = @transform_1, window_bounds = array<i64: 32, 64>}, {pipeline_mode = #tpu.pipeline_mode<synchronous>, transform_indices = @transform_2, window_bounds = array<i64: 1, 64>}, {pipeline_mode = #tpu.pipeline_mode<synchronous>, transform_indices = @transform_3, window_bounds = array<i64: 64, 128>}, {pipeline_mode = #tpu.pipeline_mode<synchronous>, transform_indices = @transform_4, window_bounds = array<i64: 1, 128>}, {transform_indices = @transform_5, window_bounds = array<i64: 16, 128>}]} {
    %c0 = arith.constant 0 : index
    %c0_0 = arith.constant 0 : index
    %0 = vector.load %arg1[%c0, %c0_0] : memref<16x32xf32, #tpu.memory_space<vmem>>, vector<16x32xf32>
    %cst = arith.constant dense<0.000000e+00> : vector<16xf32>
    %1 = vector.multi_reduction <add>, %0, %cst [1] : vector<16x32xf32> to vector<16xf32>
    %2 = vector.shape_cast %1 : vector<16xf32> to vector<16x1xf32>
    %cst_1 = arith.constant 3.200000e+01 : f32
    %3 = vector.broadcast %cst_1 : f32 to vector<16x1xf32>
    %4 = arith.divf %2, %3 : vector<16x1xf32>
    %5 = arith.mulf %0, %0 : vector<16x32xf32>
    %cst_2 = arith.constant dense<0.000000e+00> : vector<16xf32>
    %6 = vector.multi_reduction <add>, %5, %cst_2 [1] : vector<16x32xf32> to vector<16xf32>
    %7 = vector.shape_cast %6 : vector<16xf32> to vector<16x1xf32>
    %cst_3 = arith.constant 3.200000e+01 : f32
    %8 = vector.broadcast %cst_3 : f32 to vector<16x1xf32>
    %9 = arith.divf %7, %8 : vector<16x1xf32>
    %10 = arith.mulf %4, %4 : vector<16x1xf32>
    %11 = arith.subf %9, %10 : vector<16x1xf32>
    %cst_4 = arith.constant 0.000000e+00 : f32
    %12 = vector.broadcast %cst_4 : f32 to vector<16x1xf32>
    %13 = arith.maximumf %11, %12 : vector<16x1xf32>
    %14 = vector.broadcast %4 : vector<16x1xf32> to vector<16x32xf32>
    %15 = arith.subf %0, %14 : vector<16x32xf32>
    %cst_5 = arith.constant 9.99999974E-6 : f32
    %16 = vector.broadcast %cst_5 : f32 to vector<16x1xf32>
    %17 = arith.addf %13, %16 : vector<16x1xf32>
    %18 = math.rsqrt %17 : vector<16x1xf32>
    %19 = vector.broadcast %18 : vector<16x1xf32> to vector<16x32xf32>
    %20 = arith.mulf %15, %19 : vector<16x32xf32>
    %21 = arith.truncf %20 : vector<16x32xf32> to vector<16x32xbf16>
    %c0_6 = arith.constant 0 : index
    %c0_7 = arith.constant 0 : index
    %22 = vector.load %arg2[%c0_6, %c0_7] : memref<32x64xbf16, #tpu.memory_space<vmem>>, vector<32x64xbf16>
    %cst_8 = arith.constant dense<0.000000e+00> : vector<16x64xf32>
    %23 = tpu.matmul %21, %22, %cst_8 {dimension_numbers = #tpu.dot_dimension_numbers<[1], [0], [0], [1], [0, 0, 1, 1], [], []>} : vector<16x32xbf16>, vector<32x64xbf16>, vector<16x64xf32> -> vector<16x64xf32>
    %c0_9 = arith.constant 0 : index
    %c0_10 = arith.constant 0 : index
    %24 = vector.load %arg3[%c0_9, %c0_10] : memref<1x64xf32, #tpu.memory_space<vmem>>, vector<1x64xf32>
    %25 = vector.broadcast %24 : vector<1x64xf32> to vector<16x64xf32>
    %26 = arith.addf %23, %25 : vector<16x64xf32>
    %cst_11 = arith.constant 0.000000e+00 : f32
    %27 = vector.broadcast %cst_11 : f32 to vector<16x64xf32>
    %28 = arith.maximumf %26, %27 : vector<16x64xf32>
    %29 = arith.truncf %28 : vector<16x64xf32> to vector<16x64xbf16>
    %c0_12 = arith.constant 0 : index
    %c0_13 = arith.constant 0 : index
    %30 = vector.load %arg4[%c0_12, %c0_13] : memref<64x128xbf16, #tpu.memory_space<vmem>>, vector<64x128xbf16>
    %cst_14 = arith.constant dense<0.000000e+00> : vector<16x128xf32>
    %31 = tpu.matmul %29, %30, %cst_14 {dimension_numbers = #tpu.dot_dimension_numbers<[1], [0], [0], [1], [0, 0, 1, 1], [], []>} : vector<16x64xbf16>, vector<64x128xbf16>, vector<16x128xf32> -> vector<16x128xf32>
    %c0_15 = arith.constant 0 : index
    %c0_16 = arith.constant 0 : index
    %32 = vector.load %arg5[%c0_15, %c0_16] : memref<1x128xf32, #tpu.memory_space<vmem>>, vector<1x128xf32>
    %33 = vector.broadcast %32 : vector<1x128xf32> to vector<16x128xf32>
    %34 = arith.addf %31, %33 : vector<16x128xf32>
    %c0_17 = arith.constant 0 : index
    %c0_18 = arith.constant 0 : index
    %35 = vector.load %arg6[%c0_17, %c0_18] : memref<16x128xf32, #tpu.memory_space<vmem>>, vector<16x128xf32>
    tpu.vector_store %arg6[%c0_17, %c0_18], %34 {strides = array<i32>} : memref<16x128xf32, #tpu.memory_space<vmem>>, vector<16x128xf32>,
    return
  }
  func.func @transform_0(%arg0: i32) -> (i32, i32) {
    %c0_i32 = arith.constant 0 : i32
    %c0_i32_0 = arith.constant 0 : i32
    return %arg0, %c0_i32 : i32, i32
  }
  func.func @transform_1(%arg0: i32) -> (i32, i32) {
    %c0_i32 = arith.constant 0 : i32
    %c0_i32_0 = arith.constant 0 : i32
    %c0_i32_1 = arith.constant 0 : i32
    return %c0_i32, %c0_i32_0 : i32, i32
  }
  func.func @transform_2(%arg0: i32) -> (i32, i32) {
    %c0_i32 = arith.constant 0 : i32
    %c0_i32_0 = arith.constant 0 : i32
    %c0_i32_1 = arith.constant 0 : i32
    return %c0_i32, %c0_i32_0 : i32, i32
  }
  func.func @transform_3(%arg0: i32) -> (i32, i32) {
    %c0_i32 = arith.constant 0 : i32
    %c0_i32_0 = arith.constant 0 : i32
    %c0_i32_1 = arith.constant 0 : i32
    return %c0_i32, %c0_i32_0 : i32, i32
  }
  func.func @transform_4(%arg0: i32) -> (i32, i32) {
    %c0_i32 = arith.constant 0 : i32
    %c0_i32_0 = arith.constant 0 : i32
    %c0_i32_1 = arith.constant 0 : i32
    return %c0_i32, %c0_i32_0 : i32, i32
  }
  func.func @transform_5(%arg0: i32) -> (i32, i32) {
    %c0_i32 = arith.constant 0 : i32
    %c0_i32_0 = arith.constant 0 : i32
    return %arg0, %c0_i32 : i32, i32
  }
}

</mosaic_0001>

<llo_original>
// kernel: tpu_custom_call.1
$region0: #{tpu_custom_call.1}
  #allocation0 [shape = 'u32[]', space=smem, size = 0x4, offset = 0x4, fixed_abs, tag = 'smem constant byte address 0x4 - core index']
  #allocation1 [shape = 'u32[72,128]{1,0:T(1,128)}', space=vmem, size = 0x9000, scoped, tag = 'internal scratch']
  %s0 = inlined_call_operand.hbm [shape: f32[16,32], index: 0, kind: input, shape index: {}]
  %s1 = inlined_call_operand.hbm [shape: bf16[32,64], index: 1, kind: input, shape index: {}]
  %s2 = inlined_call_operand.vmem [shape: f32[1,64], index: 2, kind: input, shape index: {}]
  %s3 = inlined_call_operand.hbm [shape: bf16[64,128], index: 3, kind: input, shape index: {}]
  %s4 = inlined_call_operand.vmem [shape: f32[1,128], index: 4, kind: input, shape index: {}]
  %s5 = inlined_call_operand.hbm [shape: f32[16,128], index: 5, kind: output, shape index: {}]
  %s6 = sld [smem:[#allocation0]]
  $region42: #{tpu_custom_call.1} parent=0
    _
  %s8 = ssub.s32 1, %s6
  %s9 = scalar_select 0, %s8, %s6
  $region1: #{tpu_custom_call.1} parent=0
    #allocation2 [shape = 'u8[8192]{0}', space=vmem, size = 0x2000, scoped, tag = 'input window, operand 0, single buffered']
    #allocation3 [shape = 's32[1]{0}', space=sflag, size = 0x4, scoped, tag = 'scoped memory for tpu_custom_call.1']
    #allocation4 [shape = 's32[1]{0}', space=sflag, size = 0x4, scoped, tag = 'scoped memory for tpu_custom_call.1']
    #allocation5 [shape = 'u8[8192]{0}', space=vmem, size = 0x2000, scoped, tag = 'input window, operand 1, single buffered']
    #allocation6 [shape = 's32[1]{0}', space=sflag, size = 0x4, scoped, tag = 'scoped memory for tpu_custom_call.1']
    #allocation7 [shape = 'u8[16384]{0}', space=vmem, size = 0x4000, scoped, tag = 'input window, operand 3, single buffered']
    #allocation8 [shape = 'u8[8192]{0}', space=vmem, size = 0x2000, scoped, tag = 'output window, operand 0, single buffered']
    %10 = vsyncpa [#allocation3], 0
    %11 = vsyncpa [#allocation6], 0
    %12 = vsyncpa [#allocation4], 0
    // Predicated region
    $region2: #{tpu_custom_call.1} parent=1 // pred_check
      _
    $region3: #{tpu_custom_call.1} parent=1 // pred_check_branch
      %14 = sbr.rel (0) target = $region5
    $region4: #{tpu_custom_call.1} parent=1 // pred_region
      %16 = vsyncadd [#allocation3], 0
      %s17 = sshll.u32 %s0, 4
      %s18 = int_to_ptr.hbm [resolvable:$true] %s17
      %s19 = sshll.u32 [#allocation2], 4
      %s20 = int_to_ptr.vmem [resolvable:$true] %s19
      %25 = dma.hbm_to_vmem [thread:$0]  %s18, 256, %s20, [#allocation3], 128, 128, 8
    $region5: #{tpu_custom_call.1} parent=1 // pred_fallthru
      _
    // Predicated region
    $region6: #{tpu_custom_call.1} parent=1 // pred_check
      _
    $region7: #{tpu_custom_call.1} parent=1 // pred_check_branch
      %27 = sbr.rel (0) target = $region9
    $region8: #{tpu_custom_call.1} parent=1 // pred_region
      %29 = vsyncadd [#allocation6], 0
      %s30 = sshll.u32 %s1, 4
      %s31 = int_to_ptr.hbm [resolvable:$true] %s30
      %s32 = sshll.u32 [#allocation5], 4
      %s33 = int_to_ptr.vmem [resolvable:$true] %s32
      %38 = dma.hbm_to_vmem [thread:$0]  %s31, 256, %s33, [#allocation6], 64, 64, 4
    $region9: #{tpu_custom_call.1} parent=1 // pred_fallthru
      _
    // Predicated region
    $region10: #{tpu_custom_call.1} parent=1 // pred_check
      _
    $region11: #{tpu_custom_call.1} parent=1 // pred_check_branch
      %40 = sbr.rel (0) target = $region13
    $region12: #{tpu_custom_call.1} parent=1 // pred_region
      _
    $region13: #{tpu_custom_call.1} parent=1 // pred_fallthru
      _
    // Predicated region
    $region14: #{tpu_custom_call.1} parent=1 // pred_check
      _
    $region15: #{tpu_custom_call.1} parent=1 // pred_check_branch
      %42 = sbr.rel (0) target = $region17
    $region16: #{tpu_custom_call.1} parent=1 // pred_region
      %44 = vsyncadd [#allocation6], 0
      %s45 = sshll.u32 %s3, 4
      %s46 = int_to_ptr.hbm [resolvable:$true] %s45
      %s47 = sshll.u32 [#allocation7], 4
      %s48 = int_to_ptr.vmem [resolvable:$true] %s47
      %53 = dma.hbm_to_vmem [thread:$0]  %s46, 512, %s48, [#allocation6], 64, 64, 4
    $region17: #{tpu_custom_call.1} parent=1 // pred_fallthru
      _
    // Predicated region
    $region18: #{tpu_custom_call.1} parent=1 // pred_check
      _
    $region19: #{tpu_custom_call.1} parent=1 // pred_check_branch
      %55 = sbr.rel (0) target = $region21
    $region20: #{tpu_custom_call.1} parent=1 // pred_region
      _
    $region21: #{tpu_custom_call.1} parent=1 // pred_fallthru
      _
    // Predicated region
    $region22: #{tpu_custom_call.1} parent=1 // pred_check
      _
    $region23: #{tpu_custom_call.1} parent=1 // pred_check_branch
      %57 = sbr.rel (0) target = $region25
    $region24: #{tpu_custom_call.1} parent=1 // pred_region
      %59 = dma.done [#allocation3], 256
    $region25: #{tpu_custom_call.1} parent=1 // pred_fallthru
      _
    // Predicated region
    $region26: #{tpu_custom_call.1} parent=1 // pred_check
      _
    $region27: #{tpu_custom_call.1} parent=1 // pred_check_branch
      %61 = sbr.rel (0) target = $region29
    $region28: #{tpu_custom_call.1} parent=1 // pred_region
      %63 = dma.done [#allocation6], 256
    $region29: #{tpu_custom_call.1} parent=1 // pred_fallthru
      _
    // Predicated region
    $region30: #{tpu_custom_call.1} parent=1 // pred_check
      _
    $region31: #{tpu_custom_call.1} parent=1 // pred_check_branch
      %65 = sbr.rel (0) target = $region33
    $region32: #{tpu_custom_call.1} parent=1 // pred_region
      %67 = dma.done [#allocation6], 512
    $region33: #{tpu_custom_call.1} parent=1 // pred_fallthru
      _
    %v69 = vld [vmem:[#allocation2] sm:$0xff]
    %v70 = vld [vmem:[#allocation2 + $0x8] sm:$0xff]
    %vm71 = vcmask 261120
    %v72 = vsel %vm71, %v69, 0.0
    %73 = vadd.xlane.f32.xlu0 %v72
    %v74 = vpop.xlane.xlu0 %73
    %v75 = vsel %vm71, %v70, 0.0
    %76 = vadd.xlane.f32.xlu0 %v75
    %v77 = vpop.xlane.xlu0 %76
    %v78 = vrcp.pop 32.0
    %v79 = vmul.f32 32.0, %v78
    %v80 = vsub.f32 1.0, %v79
    %v81 = vmul.f32 %v78, %v80
    %v82 = vadd.f32 %v78, %v81
    %vm83 = vweird.f32 %v78
    %v84 = vsel %vm83, %v78, %v82
    %v85 = vmul.f32 %v74, %v84
    %v86 = vmul.f32 %v77, %v84
    %v87 = vmul.f32 %v69, %v69
    %v88 = vmul.f32 %v70, %v70
    %v89 = vsel %vm71, %v87, 0.0
    %90 = vadd.xlane.f32.xlu0 %v89
    %v91 = vpop.xlane.xlu0 %90
    %v92 = vsel %vm71, %v88, 0.0
    %93 = vadd.xlane.f32.xlu0 %v92
    %v94 = vpop.xlane.xlu0 %93
    %v95 = vmul.f32 %v91, %v84
    %v96 = vmul.f32 %v94, %v84
    %v97 = vmul.f32 %v85, %v85
    %v98 = vmul.f32 %v86, %v86
    %v99 = vsub.f32 %v95, %v97
    %v100 = vsub.f32 %v96, %v98
    %v101 = vmax.f32 %v99, 0.0
    %v102 = vmax.f32 %v100, 0.0
    %v103 = vsub.f32 %v69, %v85
    %v104 = vsub.f32 %v70, %v86
    %v105 = vadd.f32 %v101, 1e-05
    %v106 = vadd.f32 %v102, 1e-05
    %v107 = vrsqrt.pop %v105
    %v108 = vmul.f32 %v107, %v105
    %v109 = vmul.f32 %v108, %v107
    %v110 = vmul.f32 0.5, %v109
    %v111 = vsub.f32 1.5, %v110
    %v112 = vmul.f32 %v107, %v111
    %vm113 = vweird.f32 %v105
    %vm114 = vweird.f32 %v107
    %vm115 = vmor %vm113, %vm114
    %v116 = vsel %vm115, %v107, %v112
    %v117 = vrsqrt.pop %v106
    %v118 = vmul.f32 %v117, %v106
    %v119 = vmul.f32 %v118, %v117
    %v120 = vmul.f32 0.5, %v119
    %v121 = vsub.f32 1.5, %v120
    %v122 = vmul.f32 %v117, %v121
    %vm123 = vweird.f32 %v106
    %vm124 = vweird.f32 %v117
    %vm125 = vmor %vm123, %vm124
    %v126 = vsel %vm125, %v117, %v122
    %v127 = vmul.f32 %v103, %v116
    %v128 = vmul.f32 %v104, %v126
    %v129 = vpack.c.bf16 %v128, %v127
    %v130 = vld [vmem:[#allocation5] sm:$0xf]
    %v131 = vld [vmem:[#allocation5 + $0x4] sm:$0xf]
    %v132 = vld [vmem:[#allocation5 + $0x8] sm:$0xf]
    %v133 = vld [vmem:[#allocation5 + $0xc] sm:$0xf]
    %v134 = vld [vmem:[%s2] sm:$0x1]
    %v136 = vperm.slane %v134, 0
    %v142 = vunpack.c.l.b16 %v130
    %v143 = vunpack.c.l.b16 %v131
    %v144 = vunpack.c.l.b16 %v132
    %v145 = vunpack.c.l.b16 %v133
    %v146 = vpack.c.b16 %v143, %v142
    %v147 = vpack.c.b16 %v145, %v144
    %v151 = vsel %vm71, %v129, 0
    %153 = vmatpush.bf16.msra.mxu0 0
    %154 = vmatpush.bf16.msra.mxu0 0
    %155 = vmatpush.bf16.msra.mxu0 0
    %156 = vmatpush.bf16.msra.mxu0 0
    %157 = vmatpush.bf16.msra.mxu0 0
    %158 = vmatpush.bf16.msra.mxu0 0
    %159 = vmatpush.bf16.msra.mxu0 %v147
    %160 = vmatpush.bf16.msra.mxu0 %v146
    %161 = vmatmul.bf16.gmra.mxu0 %v151
    %v162 = vpop.f32.mrf.mxu0
    %v163 = vadd.f32 %v136, %v162
    %v164 = vpop.f32.mrf.mxu0
    %v165 = vadd.f32 %v136, %v164
    %166 = vdwg.mxu0
    %v167 = vmax.f32 %v163, 0.0
    %v168 = vmax.f32 %v165, 0.0
    %v169 = vpack.c.bf16 %v168, %v167
    %v170 = vld [vmem:[#allocation7] sm:$0xf]
    %v171 = vld [vmem:[#allocation7 + $0x4] sm:$0xf]
    %v172 = vld [vmem:[#allocation7 + $0x8] sm:$0xf]
    %v173 = vld [vmem:[#allocation7 + $0xc] sm:$0xf]
    %v174 = vld [vmem:[#allocation7 + $0x10] sm:$0xf]
    %v175 = vld [vmem:[#allocation7 + $0x14] sm:$0xf]
    %v176 = vld [vmem:[#allocation7 + $0x18] sm:$0xf]
    %v177 = vld [vmem:[#allocation7 + $0x1c] sm:$0xf]
    %v178 = vld [vmem:[%s4] sm:$0x1]
    %v180 = vperm.slane %v178, 0
    %v190 = vunpack.c.l.b16 %v170
    %v191 = vunpack.c.l.b16 %v171
    %v192 = vunpack.c.l.b16 %v172
    %v193 = vunpack.c.l.b16 %v173
    %v194 = vunpack.c.l.b16 %v174
    %v195 = vunpack.c.l.b16 %v175
    %v196 = vunpack.c.l.b16 %v176
    %v197 = vunpack.c.l.b16 %v177
    %v198 = vpack.c.b16 %v191, %v190
    %v199 = vpack.c.b16 %v193, %v192
    %v200 = vpack.c.b16 %v195, %v194
    %v201 = vpack.c.b16 %v197, %v196
    %vm206 = vcmask 523264
    %v208 = vsel %vm206, %v169, 0
    %210 = vmatpush.bf16.msra.mxu0 0
    %211 = vmatpush.bf16.msra.mxu0 0
    %212 = vmatpush.bf16.msra.mxu0 0
    %213 = vmatpush.bf16.msra.mxu0 0
    %214 = vmatpush.bf16.msra.mxu0 %v201
    %215 = vmatpush.bf16.msra.mxu0 %v200
    %216 = vmatpush.bf16.msra.mxu0 %v199
    %217 = vmatpush.bf16.msra.mxu0 %v198
    %218 = vmatmul.bf16.gmra.mxu0 %v208
    %v219 = vpop.f32.mrf.mxu0
    %v220 = vadd.f32 %v180, %v219
    %v221 = vpop.f32.mrf.mxu0
    %v222 = vadd.f32 %v180, %v221
    %223 = vdwg.mxu0
    %224 = vst [vmem:[#allocation8] sm:$0xff] %v220
    %225 = vst [vmem:[#allocation8 + $0x8] sm:$0xff] %v222
    // Predicated region
    $region34: #{tpu_custom_call.1} parent=1 // pred_check
      _
    $region35: #{tpu_custom_call.1} parent=1 // pred_check_branch
      %227 = sbr.rel (0) target = $region37
    $region36: #{tpu_custom_call.1} parent=1 // pred_region
      %229 = vsyncadd [#allocation4], 0
      %s230 = sshll.u32 [#allocation8], 4
      %s231 = int_to_ptr.vmem [resolvable:$true] %s230
      %s232 = sshll.u32 %s5, 4
      %s233 = int_to_ptr.hbm [resolvable:$true] %s232
      %238 = dma.vmem_to_hbm [thread:$0]  %s231, 256, %s233, [#allocation4], 128, 128, 8
    $region37: #{tpu_custom_call.1} parent=1 // pred_fallthru
      _
    // Predicated region
    $region38: #{tpu_custom_call.1} parent=1 // pred_check
      _
    $region39: #{tpu_custom_call.1} parent=1 // pred_check_branch
      %240 = sbr.rel (0) target = $region41
    $region40: #{tpu_custom_call.1} parent=1 // pred_region
      %242 = dma.done [#allocation4], 256
    $region41: #{tpu_custom_call.1} parent=1 // pred_fallthru
      _
    %243 = vsyncpa [#allocation3], 1
    %244 = vsyncpa [#allocation6], 1
    %245 = vsyncpa [#allocation4], 1

</llo_original>
